<compile_context>
chip_gen: v6e
topology: v6e:2x2x1
jax: 0.10.0
libtpu: 0.0.40
codegen_flags: <defaults>
</compile_context>

<pallas_src>
import jax
import jax.numpy as jnp
from jax.experimental import pallas as pl
from jax.experimental.pallas import tpu as pltpu

B, C, W = 2, 3, 4
N = B * C * W  # 24 — flattened lane-dense length


def _where_kernel(x_ref, t1_ref, t2_ref, o_ref):
    # All refs are (1, N) — pure per-lane VPU select, no cross-sublane movement.
    o_ref[...] = jnp.where(x_ref[...] < 0.0, t1_ref[...], t2_ref[...])


def model_forward(x, tensor1, tensor2):
    # NOTE: the cat((x, zeros), dim=1) + view chain in the torch module is dead
    # code (never returned) and is intentionally not computed.
    xf = x.reshape(1, N)
    t1f = tensor1.reshape(1, N)
    t2f = tensor2.reshape(1, N)

    out_flat = pl.pallas_call(
        _where_kernel,
        out_shape=jax.ShapeDtypeStruct((1, N), x.dtype),
        in_specs=[
            pl.BlockSpec(memory_space=pltpu.VMEM),
            pl.BlockSpec(memory_space=pltpu.VMEM),
            pl.BlockSpec(memory_space=pltpu.VMEM),
        ],
        out_specs=pl.BlockSpec(memory_space=pltpu.VMEM),
        cost_estimate=pl.CostEstimate(
            flops=N, transcendentals=0, bytes_accessed=4 * 4 * N
        ),
    )(xf, t1f, t2f)

    return out_flat.reshape(B, C, W)


if __name__ == "__main__":
    key = jax.random.PRNGKey(0)
    kx, k1, k2 = jax.random.split(key, 3)
    x = jax.random.normal(kx, (B, C, W), dtype=jnp.float32)
    tensor1 = jax.random.normal(k1, (B, C, W), dtype=jnp.float32)
    tensor2 = jax.random.normal(k2, (B, C, W), dtype=jnp.float32)

    out = model_forward(x, tensor1, tensor2)
    jax.block_until_ready(out)

    # sanity check against plain-JAX reference
    ref = jnp.where(x < 0.0, tensor1, tensor2)
    assert out.shape == (B, C, W)
    assert jnp.allclose(out, ref), "mismatch vs reference"
    print("KERNEL_OK")
</pallas_src>

<mosaic_0001>
module attributes {stable_mosaic.version = 11 : i64} {
  func.func @_where_kernel(%arg0: memref<1x24xf32, #tpu.memory_space<vmem>>, %arg1: memref<1x24xf32, #tpu.memory_space<vmem>>, %arg2: memref<1x24xf32, #tpu.memory_space<vmem>>, %arg3: memref<1x24xf32, #tpu.memory_space<vmem>>) attributes {dimension_semantics = [], scalar_prefetch = 0 : i64, scratch_operands = 0 : i64, tpu.core_type = #tpu.core_type<tc>} {
    %c0 = arith.constant 0 : index
    %c0_0 = arith.constant 0 : index
    %0 = vector.load %arg0[%c0, %c0_0] : memref<1x24xf32, #tpu.memory_space<vmem>>, vector<1x24xf32>
    %cst = arith.constant 0.000000e+00 : f32
    %1 = vector.broadcast %cst : f32 to vector<1x24xf32>
    %2 = arith.cmpf olt, %0, %1 : vector<1x24xf32>
    %c0_1 = arith.constant 0 : index
    %c0_2 = arith.constant 0 : index
    %3 = vector.load %arg1[%c0_1, %c0_2] : memref<1x24xf32, #tpu.memory_space<vmem>>, vector<1x24xf32>
    %c0_3 = arith.constant 0 : index
    %c0_4 = arith.constant 0 : index
    %4 = vector.load %arg2[%c0_3, %c0_4] : memref<1x24xf32, #tpu.memory_space<vmem>>, vector<1x24xf32>
    %5 = arith.select %2, %3, %4 : vector<1x24xi1>, vector<1x24xf32>
    %c0_5 = arith.constant 0 : index
    %c0_6 = arith.constant 0 : index
    %6 = vector.load %arg3[%c0_5, %c0_6] : memref<1x24xf32, #tpu.memory_space<vmem>>, vector<1x24xf32>
    tpu.vector_store %arg3[%c0_5, %c0_6], %5 {strides = array<i32>} : memref<1x24xf32, #tpu.memory_space<vmem>>, vector<1x24xf32>,
    return
  }
}

</mosaic_0001>

<llo_original>
// kernel: tpu_custom_call.1
$region0: #{tpu_custom_call.1}
  #allocation0 [shape = 'u32[]', space=smem, size = 0x4, offset = 0x4, fixed_abs, tag = 'smem constant byte address 0x4 - core index']
  #allocation1 [shape = 'u32[144,128]{1,0:T(1,128)}', space=vmem, size = 0x12000, scoped, tag = 'internal scratch']
  %s0 = inlined_call_operand.hbm [shape: f32[1,24], index: 0, kind: input, shape index: {}]
  %s1 = inlined_call_operand.vmem [shape: f32[1,24], index: 1, kind: input, shape index: {}]
  %s2 = inlined_call_operand.vmem [shape: f32[1,24], index: 2, kind: input, shape index: {}]
  %s3 = inlined_call_operand.hbm [shape: f32[1,24], index: 3, kind: output, shape index: {}]
  %s4 = sld [smem:[#allocation0]]
  $region26: #{tpu_custom_call.1} parent=0
    _
  %s6 = ssub.s32 1, %s4
  %s7 = scalar_select 0, %s6, %s4
  $region1: #{tpu_custom_call.1} parent=0
    #allocation2 [shape = 'u8[512]{0}', space=vmem, size = 0x400, scoped, tag = 'input window, operand 0, single buffered']
    #allocation3 [shape = 's32[1]{0}', space=sflag, size = 0x4, scoped, tag = 'scoped memory for tpu_custom_call.1']
    #allocation4 [shape = 's32[1]{0}', space=sflag, size = 0x4, scoped, tag = 'scoped memory for tpu_custom_call.1']
    #allocation5 [shape = 'u8[512]{0}', space=vmem, size = 0x400, scoped, tag = 'output window, operand 0, single buffered']
    %8 = vsyncpa [#allocation3], 0
    %9 = vsyncpa [#allocation4], 0
    // Predicated region
    $region2: #{tpu_custom_call.1} parent=1 // pred_check
      _
    $region3: #{tpu_custom_call.1} parent=1 // pred_check_branch
      %11 = sbr.rel (0) target = $region5
    $region4: #{tpu_custom_call.1} parent=1 // pred_region
      %s13 = ssub.s32 16, 16
      %14 = vsyncadd [#allocation3], %s13
      %s16 = sshll.u32 [#allocation2], 4
      %s17 = int_to_ptr.vmem [resolvable:$true] %s16
      %19 = dma.hbm_to_vmem [thread:$0]  %s0, 16, %s17, [#allocation3]
    $region5: #{tpu_custom_call.1} parent=1 // pred_fallthru
      _
    // Predicated region
    $region6: #{tpu_custom_call.1} parent=1 // pred_check
      _
    $region7: #{tpu_custom_call.1} parent=1 // pred_check_branch
      %21 = sbr.rel (0) target = $region9
    $region8: #{tpu_custom_call.1} parent=1 // pred_region
      _
    $region9: #{tpu_custom_call.1} parent=1 // pred_fallthru
      _
    // Predicated region
    $region10: #{tpu_custom_call.1} parent=1 // pred_check
      _
    $region11: #{tpu_custom_call.1} parent=1 // pred_check_branch
      %23 = sbr.rel (0) target = $region13
    $region12: #{tpu_custom_call.1} parent=1 // pred_region
      _
    $region13: #{tpu_custom_call.1} parent=1 // pred_fallthru
      _
    // Predicated region
    $region14: #{tpu_custom_call.1} parent=1 // pred_check
      _
    $region15: #{tpu_custom_call.1} parent=1 // pred_check_branch
      %25 = sbr.rel (0) target = $region17
    $region16: #{tpu_custom_call.1} parent=1 // pred_region
      %26 = dma.done [#allocation3], 16
    $region17: #{tpu_custom_call.1} parent=1 // pred_fallthru
      _
    %v27 = vld [vmem:[#allocation2] sm:$0x1]
    %vm28 = vcmp.lt.f32.partialorder %v27, 0.0
    %v29 = vld [vmem:[%s1] sm:$0x1]
    %v30 = vld [vmem:[%s2] sm:$0x1]
    %v31 = vsel %vm28, %v29, %v30
    %vm32 = vcmask 188416
    %33 = vst.msk [vmem:[#allocation5] sm:$0x1] %vm32, %v31
    // Predicated region
    $region18: #{tpu_custom_call.1} parent=1 // pred_check
      _
    $region19: #{tpu_custom_call.1} parent=1 // pred_check_branch
      %35 = sbr.rel (0) target = $region21
    $region20: #{tpu_custom_call.1} parent=1 // pred_region
      %s37 = ssub.s32 16, 16
      %38 = vsyncadd [#allocation4], %s37
      %s40 = sshll.u32 [#allocation5], 4
      %s41 = int_to_ptr.vmem [resolvable:$true] %s40
      %43 = dma.vmem_to_hbm [thread:$0]  %s41, 16, %s3, [#allocation4]
    $region21: #{tpu_custom_call.1} parent=1 // pred_fallthru
      _
    // Predicated region
    $region22: #{tpu_custom_call.1} parent=1 // pred_check
      _
    $region23: #{tpu_custom_call.1} parent=1 // pred_check_branch
      %45 = sbr.rel (0) target = $region25
    $region24: #{tpu_custom_call.1} parent=1 // pred_region
      %46 = dma.done [#allocation4], 16
    $region25: #{tpu_custom_call.1} parent=1 // pred_fallthru
      _
    %47 = vsyncpa [#allocation3], 1
    %48 = vsyncpa [#allocation4], 1

</llo_original>
